<compile_context>
chip_gen: v5e
topology: v5e:2x2
jax: 0.10.0
libtpu: 0.0.40
codegen_flags: <defaults>
</compile_context>

<pallas_src>
import functools

import jax
import jax.numpy as jnp
from jax.experimental import pallas as pl
from jax.experimental.pallas import tpu as pltpu


def sublayer_connection_kernel(
    x_ref,      # (TN, D) input token tile
    mask_ref,   # (TN, D) pre-scaled dropout keep mask (0 or 1/(1-p))
    a2_ref,     # (1, D)  LayerNorm scale
    b2_ref,     # (1, D)  LayerNorm bias
    w_ref,      # (D, D)  sublayer Linear weight (in, out)
    bias_ref,   # (1, D)  sublayer Linear bias
    o_ref,      # (TN, D) output tile
    *,
    eps: float,
    matmul_dtype,
):
    x = x_ref[...].astype(jnp.float32)                          # (TN, D)
    d = x.shape[-1]

    # ---- LayerNorm (torch semantics: unbiased std, divide by std + eps) ----
    mean = jnp.mean(x, axis=-1, keepdims=True)                  # (TN, 1)
    diff = x - mean
    var_unbiased = jnp.sum(diff * diff, axis=-1, keepdims=True) * jnp.float32(
        1.0 / (d - 1)
    )
    std = jnp.sqrt(var_unbiased)
    # One (TN, 1) reciprocal + broadcast multiply instead of a (TN, D) divide.
    inv = jnp.float32(1.0) / (std + jnp.float32(eps))
    normed = a2_ref[...] * (diff * inv) + b2_ref[...]

    # ---- sublayer: Linear(D -> D) on the MXU ----
    # matmul_dtype=jnp.bfloat16 is recommended on v6e/v7x (full-rate MXU,
    # half the W VMEM footprint); default f32 matches the torch reference.
    y = jnp.dot(
        normed.astype(matmul_dtype),
        w_ref[...].astype(matmul_dtype),
        preferred_element_type=jnp.float32,
    )
    y = y + bias_ref[...]

    # ---- dropout (mask already scaled by 1/keep_prob in the wrapper) ----
    y = y * mask_ref[...]

    # ---- residual ----
    o_ref[...] = (x + y).astype(o_ref.dtype)


def _pick_block_rows(n: int, target: int) -> int:
    """Largest multiple-of-8 divisor of n that is <= target (else full n)."""
    if n <= target:
        return n
    start = (min(target, n) // 8) * 8
    for cand in range(start, 7, -8):
        if n % cand == 0:
            return cand
    return n


def make_dropout_mask(key, shape, dropout_p):
    """Pre-scaled inverted-dropout keep mask: values in {0, 1/(1-p)}."""
    if dropout_p <= 0.0:
        return jnp.ones(shape, dtype=jnp.float32)
    keep_prob = 1.0 - dropout_p
    keep = jax.random.bernoulli(key, keep_prob, shape)
    return keep.astype(jnp.float32) * jnp.float32(1.0 / keep_prob)


def sublayer_connection(
    x, a2, b2, w, bias, scaled_keep_mask, *,
    eps=1e-6, matmul_dtype=jnp.float32, block_rows=512,
):
    """x: (B, S, D) float32; scaled_keep_mask: (B*S, D) or (B, S, D)."""
    B, S, D = x.shape
    N = B * S
    x2d = x.reshape(N, D).astype(jnp.float32)
    mask2d = scaled_keep_mask.reshape(N, D).astype(jnp.float32)
    a2_2d = a2.reshape(1, D).astype(jnp.float32)
    b2_2d = b2.reshape(1, D).astype(jnp.float32)
    bias_2d = bias.reshape(1, D).astype(jnp.float32)
    w = w.astype(jnp.float32)

    tn = _pick_block_rows(N, block_rows)
    grid = (N // tn,)

    kernel = functools.partial(
        sublayer_connection_kernel, eps=eps, matmul_dtype=matmul_dtype
    )

    cost = pl.CostEstimate(
        flops=2 * N * D * D + 10 * N * D,
        transcendentals=N,                               # one sqrt per row
        bytes_accessed=4 * (3 * N * D + D * D + 3 * D),  # x, mask, out, W, params
    )

    out2d = pl.pallas_call(
        kernel,
        out_shape=jax.ShapeDtypeStruct((N, D), jnp.float32),
        grid=grid,
        in_specs=[
            pl.BlockSpec((tn, D), lambda i: (i, 0)),   # x     (tiled over tokens)
            pl.BlockSpec((tn, D), lambda i: (i, 0)),   # mask  (tiled over tokens)
            pl.BlockSpec((1, D), lambda i: (0, 0)),    # a_2   (VMEM-resident)
            pl.BlockSpec((1, D), lambda i: (0, 0)),    # b_2   (VMEM-resident)
            pl.BlockSpec((D, D), lambda i: (0, 0)),    # W     (VMEM-resident)
            pl.BlockSpec((1, D), lambda i: (0, 0)),    # bias  (VMEM-resident)
        ],
        out_specs=pl.BlockSpec((tn, D), lambda i: (i, 0)),
        compiler_params=pltpu.CompilerParams(
            dimension_semantics=("parallel",),   # token rows are independent
        ),
        cost_estimate=cost,
    )(x2d, mask2d, a2_2d, b2_2d, w, bias_2d)

    return out2d.reshape(B, S, D)


def _reference(x, a2, b2, w, bias, scaled_keep_mask, eps):
    """Pure-JAX reference with identical (mask-driven) dropout."""
    B, S, D = x.shape
    mean = jnp.mean(x, axis=-1, keepdims=True)
    var = jnp.sum((x - mean) ** 2, axis=-1, keepdims=True) / (D - 1)
    std = jnp.sqrt(var)
    normed = a2 * (x - mean) / (std + eps) + b2
    y = jnp.einsum(
        "bsd,de->bse", normed, w, precision=jax.lax.Precision.HIGHEST
    ) + bias
    y = y * scaled_keep_mask.reshape(B, S, D)
    return x + y


if __name__ == "__main__":
    # Small but lane-dense shapes: hidden size a multiple of 128 so output
    # stores are unmasked full-lane vst; token axis tiled into 128-row blocks.
    B, S, D = 2, 128, 128
    dropout_p = 0.1
    eps = 1e-6

    key = jax.random.PRNGKey(0)
    kx, kw, kb, kd = jax.random.split(key, 4)

    x = jax.random.normal(kx, (B, S, D), dtype=jnp.float32)

    # LayerNorm params as in __init__: a_2 = ones(size), b_2 = zeros(size)
    a2 = jnp.ones((D,), dtype=jnp.float32)
    b2 = jnp.zeros((D,), dtype=jnp.float32)

    # Deterministic synthetic sublayer (Linear(size, size)), layout (in, out).
    w = jax.random.normal(kw, (D, D), dtype=jnp.float32) * (1.0 / jnp.sqrt(D))
    bias = jax.random.normal(kb, (D,), dtype=jnp.float32) * 0.01

    # Training-mode dropout mask (pre-scaled by 1/(1-p)), shared with the ref.
    mask = make_dropout_mask(kd, (B * S, D), dropout_p)

    out = sublayer_connection(
        x, a2, b2, w, bias, mask, eps=eps, block_rows=128
    )
    out = jax.block_until_ready(out)

    ref = _reference(x, a2, b2, w, bias, mask, eps)
    assert out.shape == (B, S, D) and out.dtype == jnp.float32
    assert bool(jnp.all(jnp.isfinite(out)))
    # Loose tolerance to absorb MXU vs XLA f32-matmul pass differences.
    assert bool(jnp.allclose(out, ref, atol=1e-2, rtol=1e-2)), (
        "kernel output mismatch vs reference"
    )
    print("KERNEL_OK")
</pallas_src>

<mosaic_0001>
module attributes {stable_mosaic.version = 11 : i64} {
  func.func @sublayer_connection_kernel(%arg0: i32, %arg1: memref<128x128xf32, #tpu.memory_space<vmem>>, %arg2: memref<128x128xf32, #tpu.memory_space<vmem>>, %arg3: memref<1x128xf32, #tpu.memory_space<vmem>>, %arg4: memref<1x128xf32, #tpu.memory_space<vmem>>, %arg5: memref<128x128xf32, #tpu.memory_space<vmem>>, %arg6: memref<1x128xf32, #tpu.memory_space<vmem>>, %arg7: memref<128x128xf32, #tpu.memory_space<vmem>>) attributes {dimension_semantics = [#tpu.dimension_semantics<parallel>], iteration_bounds = array<i64: 2>, scalar_prefetch = 0 : i64, scratch_operands = 0 : i64, tpu.core_type = #tpu.core_type<tc>, window_params = [{transform_indices = @transform_0, window_bounds = array<i64: 128, 128>}, {transform_indices = @transform_1, window_bounds = array<i64: 128, 128>}, {pipeline_mode = #tpu.pipeline_mode<synchronous>, transform_indices = @transform_2, window_bounds = array<i64: 1, 128>}, {pipeline_mode = #tpu.pipeline_mode<synchronous>, transform_indices = @transform_3, window_bounds = array<i64: 1, 128>}, {pipeline_mode = #tpu.pipeline_mode<synchronous>, transform_indices = @transform_4, window_bounds = array<i64: 128, 128>}, {pipeline_mode = #tpu.pipeline_mode<synchronous>, transform_indices = @transform_5, window_bounds = array<i64: 1, 128>}, {transform_indices = @transform_6, window_bounds = array<i64: 128, 128>}]} {
    %c0 = arith.constant 0 : index
    %c0_0 = arith.constant 0 : index
    %0 = vector.load %arg1[%c0, %c0_0] : memref<128x128xf32, #tpu.memory_space<vmem>>, vector<128x128xf32>
    %cst = arith.constant dense<0.000000e+00> : vector<128xf32>
    %1 = vector.multi_reduction <add>, %0, %cst [1] : vector<128x128xf32> to vector<128xf32>
    %2 = vector.shape_cast %1 : vector<128xf32> to vector<128x1xf32>
    %cst_1 = arith.constant 1.280000e+02 : f32
    %3 = vector.broadcast %cst_1 : f32 to vector<128x1xf32>
    %4 = arith.divf %2, %3 : vector<128x1xf32>
    %5 = vector.broadcast %4 : vector<128x1xf32> to vector<128x128xf32>
    %6 = arith.subf %0, %5 : vector<128x128xf32>
    %7 = arith.mulf %6, %6 : vector<128x128xf32>
    %cst_2 = arith.constant dense<0.000000e+00> : vector<128xf32>
    %8 = vector.multi_reduction <add>, %7, %cst_2 [1] : vector<128x128xf32> to vector<128xf32>
    %9 = vector.shape_cast %8 : vector<128xf32> to vector<128x1xf32>
    %cst_3 = arith.constant 0.00787401571 : f32
    %10 = vector.broadcast %cst_3 : f32 to vector<128x1xf32>
    %11 = arith.mulf %9, %10 : vector<128x1xf32>
    %12 = math.sqrt %11 : vector<128x1xf32>
    %cst_4 = arith.constant 9.99999997E-7 : f32
    %13 = vector.broadcast %cst_4 : f32 to vector<128x1xf32>
    %14 = arith.addf %12, %13 : vector<128x1xf32>
    %cst_5 = arith.constant 1.000000e+00 : f32
    %15 = vector.broadcast %cst_5 : f32 to vector<128x1xf32>
    %16 = arith.divf %15, %14 : vector<128x1xf32>
    %c0_6 = arith.constant 0 : index
    %c0_7 = arith.constant 0 : index
    %17 = vector.load %arg3[%c0_6, %c0_7] : memref<1x128xf32, #tpu.memory_space<vmem>>, vector<1x128xf32>
    %18 = vector.broadcast %16 : vector<128x1xf32> to vector<128x128xf32>
    %19 = arith.mulf %6, %18 : vector<128x128xf32>
    %20 = vector.broadcast %17 : vector<1x128xf32> to vector<128x128xf32>
    %21 = arith.mulf %20, %19 : vector<128x128xf32>
    %c0_8 = arith.constant 0 : index
    %c0_9 = arith.constant 0 : index
    %22 = vector.load %arg4[%c0_8, %c0_9] : memref<1x128xf32, #tpu.memory_space<vmem>>, vector<1x128xf32>
    %23 = vector.broadcast %22 : vector<1x128xf32> to vector<128x128xf32>
    %24 = arith.addf %21, %23 : vector<128x128xf32>
    %c0_10 = arith.constant 0 : index
    %c0_11 = arith.constant 0 : index
    %25 = vector.load %arg5[%c0_10, %c0_11] : memref<128x128xf32, #tpu.memory_space<vmem>>, vector<128x128xf32>
    %cst_12 = arith.constant dense<0.000000e+00> : vector<128x128xf32>
    %26 = tpu.matmul %24, %25, %cst_12 {dimension_numbers = #tpu.dot_dimension_numbers<[1], [0], [0], [1], [0, 0, 1, 1], [], []>} : vector<128x128xf32>, vector<128x128xf32>, vector<128x128xf32> -> vector<128x128xf32>
    %c0_13 = arith.constant 0 : index
    %c0_14 = arith.constant 0 : index
    %27 = vector.load %arg6[%c0_13, %c0_14] : memref<1x128xf32, #tpu.memory_space<vmem>>, vector<1x128xf32>
    %28 = vector.broadcast %27 : vector<1x128xf32> to vector<128x128xf32>
    %29 = arith.addf %26, %28 : vector<128x128xf32>
    %c0_15 = arith.constant 0 : index
    %c0_16 = arith.constant 0 : index
    %30 = vector.load %arg2[%c0_15, %c0_16] : memref<128x128xf32, #tpu.memory_space<vmem>>, vector<128x128xf32>
    %31 = arith.mulf %29, %30 : vector<128x128xf32>
    %32 = arith.addf %0, %31 : vector<128x128xf32>
    %c0_17 = arith.constant 0 : index
    %c0_18 = arith.constant 0 : index
    %33 = vector.load %arg7[%c0_17, %c0_18] : memref<128x128xf32, #tpu.memory_space<vmem>>, vector<128x128xf32>
    tpu.vector_store %arg7[%c0_17, %c0_18], %32 {strides = array<i32>} : memref<128x128xf32, #tpu.memory_space<vmem>>, vector<128x128xf32>,
    return
  }
  func.func @transform_0(%arg0: i32) -> (i32, i32) {
    %c0_i32 = arith.constant 0 : i32
    %c0_i32_0 = arith.constant 0 : i32
    return %arg0, %c0_i32 : i32, i32
  }
  func.func @transform_1(%arg0: i32) -> (i32, i32) {
    %c0_i32 = arith.constant 0 : i32
    %c0_i32_0 = arith.constant 0 : i32
    return %arg0, %c0_i32 : i32, i32
  }
  func.func @transform_2(%arg0: i32) -> (i32, i32) {
    %c0_i32 = arith.constant 0 : i32
    %c0_i32_0 = arith.constant 0 : i32
    %c0_i32_1 = arith.constant 0 : i32
    return %c0_i32, %c0_i32_0 : i32, i32
  }
  func.func @transform_3(%arg0: i32) -> (i32, i32) {
    %c0_i32 = arith.constant 0 : i32
    %c0_i32_0 = arith.constant 0 : i32
    %c0_i32_1 = arith.constant 0 : i32
    return %c0_i32, %c0_i32_0 : i32, i32
  }
  func.func @transform_4(%arg0: i32) -> (i32, i32) {
    %c0_i32 = arith.constant 0 : i32
    %c0_i32_0 = arith.constant 0 : i32
    %c0_i32_1 = arith.constant 0 : i32
    return %c0_i32, %c0_i32_0 : i32, i32
  }
  func.func @transform_5(%arg0: i32) -> (i32, i32) {
    %c0_i32 = arith.constant 0 : i32
    %c0_i32_0 = arith.constant 0 : i32
    %c0_i32_1 = arith.constant 0 : i32
    return %c0_i32, %c0_i32_0 : i32, i32
  }
  func.func @transform_6(%arg0: i32) -> (i32, i32) {
    %c0_i32 = arith.constant 0 : i32
    %c0_i32_0 = arith.constant 0 : i32
    return %arg0, %c0_i32 : i32, i32
  }
}

</mosaic_0001>

<llo_original>
// kernel: tpu_custom_call.1
$region0: #{tpu_custom_call.1}
  #allocation0 [shape = 'u32[]', space=smem, size = 0x4, offset = 0x4, fixed_abs, tag = 'smem constant byte address 0x4 - core index']
  #allocation1 [shape = 'u32[72,128]{1,0:T(1,128)}', space=vmem, size = 0x9000, scoped, tag = 'internal scratch']
  %s0 = inlined_call_operand.hbm [shape: f32[256,128], index: 0, kind: input, shape index: {}]
  %s1 = inlined_call_operand.hbm [shape: f32[256,128], index: 1, kind: input, shape index: {}]
  %s2 = inlined_call_operand.vmem [shape: f32[1,128], index: 2, kind: input, shape index: {}]
  %s3 = inlined_call_operand.vmem [shape: f32[1,128], index: 3, kind: input, shape index: {}]
  %s4 = inlined_call_operand.hbm [shape: f32[128,128], index: 4, kind: input, shape index: {}]
  %s5 = inlined_call_operand.vmem [shape: f32[1,128], index: 5, kind: input, shape index: {}]
  %s6 = inlined_call_operand.hbm [shape: f32[256,128], index: 6, kind: output, shape index: {}]
  %s7 = sld [smem:[#allocation0]]
  $region69: #{tpu_custom_call.1} parent=0
    _
  %s9 = ssub.s32 1, %s7
  %s10 = scalar_select 0, %s9, %s7
  $region1: #{tpu_custom_call.1} parent=0
    #allocation2 [shape = 'u8[131072]{0}', space=vmem, size = 0x20000, scoped, tag = 'input window, operand 0']
    #allocation3 [shape = 's32[2]{0}', space=sflag, size = 0x8, scoped, tag = 'scoped memory for tpu_custom_call.1']
    #allocation4 [shape = 's32[2]{0}', space=sflag, size = 0x8, scoped, tag = 'scoped memory for tpu_custom_call.1']
    #allocation5 [shape = 'u8[131072]{0}', space=vmem, size = 0x20000, scoped, tag = 'input window, operand 1']
    #allocation6 [shape = 's32[2]{0}', space=sflag, size = 0x8, scoped, tag = 'scoped memory for tpu_custom_call.1']
    #allocation7 [shape = 'u8[65536]{0}', space=vmem, size = 0x10000, scoped, tag = 'input window, operand 4, single buffered']
    #allocation8 [shape = 'u8[131072]{0}', space=vmem, size = 0x20000, scoped, tag = 'output window, operand 0']
    %11 = vsyncpa [#allocation3], 0
    %s12 = scalar_lea.sflag [#allocation3], 1
    %13 = vsyncpa %s12, 0
    %14 = vsyncpa [#allocation6], 0
    %s15 = scalar_lea.sflag [#allocation6], 1
    %16 = vsyncpa %s15, 0
    %17 = vsyncpa [#allocation4], 0
    %s18 = scalar_lea.sflag [#allocation4], 1
    %19 = vsyncpa %s18, 0
    loop: start=0, step=1, limit=4
    $region2: #{tpu_custom_call.1} parent=1 // loop_pre_header
      _
    $region3: #{tpu_custom_call.1} parent=1 // loop_header
      %s21 = sphi 0, %s25
      %p22 = scmp.ge.s32.totalorder %s21, 4
      %s31 = sphi 0, %s33
      %s34 = sphi 0, %s31
      %s35 = sphi 0, %s34
      %s51 = sphi 0, %s35
      %s57 = sphi 0, %s59
      %s60 = sphi 0, %s57
      %s61 = sphi 0, %s60
      %s77 = sphi 0, %s61
      %s81 = sphi 0, %s81
      %s83 = sphi 0, %s81
      %s84 = sphi 0, %s83
      %s98 = sphi 0, %s84
      %s102 = sphi 0, %s102
      %s104 = sphi 0, %s102
      %s105 = sphi 0, %s104
      %s119 = sphi 0, %s105
      %s123 = sphi 0, %s123
      %s125 = sphi 0, %s123
      %s126 = sphi 0, %s125
      %s140 = sphi 0, %s126
      %s144 = sphi 0, %s144
      %s146 = sphi 0, %s144
      %s147 = sphi 0, %s146
      %s161 = sphi 0, %s147
      %s167 = sphi 0, %s169
      %s170 = sphi 0, %s167
      %s171 = sphi 0, %s170
      %s187 = sphi 0, %s171
    $region4: #{tpu_custom_call.1} parent=1 // loop_header_branch
      %24 = sbr.rel (%p22) target = $region8
    $region5: #{tpu_custom_call.1} parent=1 // loop_body
      %s26 = ssub.s32 %s21, 1
      %s27 = ssub.s32 %s21, 2
      %s28 = sadd.s32 %s21, 1
      %s29 = ssub.s32 %s21, %s28
      %p30 = scmp.eq.s32.totalorder %s29, 0
      %s32 = sadd.s32 %s31, 1
      %s33 = scalar_select %p30, %s31, %s32
      %p36 = pneg %p30
      %p37 = scmp.eq.s32.totalorder %s21, 1
      %p38 = por %p36, %p37
      %p39 = scmp.ne.s32.totalorder %s31, %s34
      %p40 = scmp.eq.s32.totalorder %s21, 0
      %p41 = por %p39, %p40
      %p42 = scmp.ne.s32.totalorder %s31, %s34
      %p43 = scmp.eq.s32.totalorder %s26, 1
      %p44 = por %p42, %p43
      %p45 = scmp.ne.s32.totalorder %s34, %s35
      %p46 = scmp.eq.s32.totalorder %s26, 0
      %p47 = por %p45, %p46
      %p48 = scmp.ne.s32.totalorder %s34, %s35
      %p49 = scmp.eq.s32.totalorder %s27, 1
      %p50 = por %p48, %p49
      %p52 = scmp.ne.s32.totalorder %s35, %s51
      %p53 = scmp.eq.s32.totalorder %s27, 0
      %p54 = por %p52, %p53
      %s55 = ssub.s32 %s21, %s28
      %p56 = scmp.eq.s32.totalorder %s55, 0
      %s58 = sadd.s32 %s57, 1
      %s59 = scalar_select %p56, %s57, %s58
      %p62 = pneg %p56
      %p63 = scmp.eq.s32.totalorder %s21, 1
      %p64 = por %p62, %p63
      %p65 = scmp.ne.s32.totalorder %s57, %s60
      %p66 = scmp.eq.s32.totalorder %s21, 0
      %p67 = por %p65, %p66
      %p68 = scmp.ne.s32.totalorder %s57, %s60
      %p69 = scmp.eq.s32.totalorder %s26, 1
      %p70 = por %p68, %p69
      %p71 = scmp.ne.s32.totalorder %s60, %s61
      %p72 = scmp.eq.s32.totalorder %s26, 0
      %p73 = por %p71, %p72
      %p74 = scmp.ne.s32.totalorder %s60, %s61
      %p75 = scmp.eq.s32.totalorder %s27, 1
      %p76 = por %p74, %p75
      %p78 = scmp.ne.s32.totalorder %s61, %s77
      %p79 = scmp.eq.s32.totalorder %s27, 0
      %p80 = por %p78, %p79
      %s82 = sadd.s32 %s81, 1
      %p85 = scmp.eq.s32.totalorder %s21, 1
      %p86 = scmp.ne.s32.totalorder %s81, %s83
      %p87 = scmp.eq.s32.totalorder %s21, 0
      %p88 = por %p86, %p87
      %p89 = scmp.ne.s32.totalorder %s81, %s83
      %p90 = scmp.eq.s32.totalorder %s26, 1
      %p91 = por %p89, %p90
      %p92 = scmp.ne.s32.totalorder %s83, %s84
      %p93 = scmp.eq.s32.totalorder %s26, 0
      %p94 = por %p92, %p93
      %p95 = scmp.ne.s32.totalorder %s83, %s84
      %p96 = scmp.eq.s32.totalorder %s27, 1
      %p97 = por %p95, %p96
      %p99 = scmp.ne.s32.totalorder %s84, %s98
      %p100 = scmp.eq.s32.totalorder %s27, 0
      %p101 = por %p99, %p100
      %s103 = sadd.s32 %s102, 1
      %p106 = scmp.eq.s32.totalorder %s21, 1
      %p107 = scmp.ne.s32.totalorder %s102, %s104
      %p108 = scmp.eq.s32.totalorder %s21, 0
      %p109 = por %p107, %p108
      %p110 = scmp.ne.s32.totalorder %s102, %s104
      %p111 = scmp.eq.s32.totalorder %s26, 1
      %p112 = por %p110, %p111
      %p113 = scmp.ne.s32.totalorder %s104, %s105
      %p114 = scmp.eq.s32.totalorder %s26, 0
      %p115 = por %p113, %p114
      %p116 = scmp.ne.s32.totalorder %s104, %s105
      %p117 = scmp.eq.s32.totalorder %s27, 1
      %p118 = por %p116, %p117
      %p120 = scmp.ne.s32.totalorder %s105, %s119
      %p121 = scmp.eq.s32.totalorder %s27, 0
      %p122 = por %p120, %p121
      %s124 = sadd.s32 %s123, 1
      %p127 = scmp.eq.s32.totalorder %s21, 1
      %p128 = scmp.ne.s32.totalorder %s123, %s125
      %p129 = scmp.eq.s32.totalorder %s21, 0
      %p130 = por %p128, %p129
      %p131 = scmp.ne.s32.totalorder %s123, %s125
      %p132 = scmp.eq.s32.totalorder %s26, 1
      %p133 = por %p131, %p132
      %p134 = scmp.ne.s32.totalorder %s125, %s126
      %p135 = scmp.eq.s32.totalorder %s26, 0
      %p136 = por %p134, %p135
      %p137 = scmp.ne.s32.totalorder %s125, %s126
      %p138 = scmp.eq.s32.totalorder %s27, 1
      %p139 = por %p137, %p138
      %p141 = scmp.ne.s32.totalorder %s126, %s140
      %p142 = scmp.eq.s32.totalorder %s27, 0
      %p143 = por %p141, %p142
      %s145 = sadd.s32 %s144, 1
      %p148 = scmp.eq.s32.totalorder %s21, 1
      %p149 = scmp.ne.s32.totalorder %s144, %s146
      %p150 = scmp.eq.s32.totalorder %s21, 0
      %p151 = por %p149, %p150
      %p152 = scmp.ne.s32.totalorder %s144, %s146
      %p153 = scmp.eq.s32.totalorder %s26, 1
      %p154 = por %p152, %p153
      %p155 = scmp.ne.s32.totalorder %s146, %s147
      %p156 = scmp.eq.s32.totalorder %s26, 0
      %p157 = por %p155, %p156
      %p158 = scmp.ne.s32.totalorder %s146, %s147
      %p159 = scmp.eq.s32.totalorder %s27, 1
      %p160 = por %p158, %p159
      %p162 = scmp.ne.s32.totalorder %s147, %s161
      %p163 = scmp.eq.s32.totalorder %s27, 0
      %p164 = por %p162, %p163
      %s165 = ssub.s32 %s21, %s28
      %p166 = scmp.eq.s32.totalorder %s165, 0
      %s168 = sadd.s32 %s167, 1
      %s169 = scalar_select %p166, %s167, %s168
      %p172 = pneg %p166
      %p173 = scmp.eq.s32.totalorder %s21, 1
      %p174 = por %p172, %p173
      %p175 = scmp.ne.s32.totalorder %s167, %s170
      %p176 = scmp.eq.s32.totalorder %s21, 0
      %p177 = por %p175, %p176
      %p178 = scmp.ne.s32.totalorder %s167, %s170
      %p179 = scmp.eq.s32.totalorder %s26, 1
      %p180 = por %p178, %p179
      %p181 = scmp.ne.s32.totalorder %s170, %s171
      %p182 = scmp.eq.s32.totalorder %s26, 0
      %p183 = por %p181, %p182
      %p184 = scmp.ne.s32.totalorder %s170, %s171
      %p185 = scmp.eq.s32.totalorder %s27, 1
      %p186 = por %p184, %p185
      %p188 = scmp.ne.s32.totalorder %s171, %s187
      %p189 = scmp.eq.s32.totalorder %s27, 0
      %p190 = por %p188, %p189
      %p191 = scmp.le.s32.totalorder 1, %s21
      %p192 = scmp.lt.s32.totalorder %s21, 3
      %p193 = pnand %p191, %p192
      %p194 = pneg %p193
      // Predicated region
      $region9: #{tpu_custom_call.1} parent=5 // pred_check
        _
      $region10: #{tpu_custom_call.1} parent=5 // pred_check_branch
        %196 = sbr.rel (%p193) target = $region12
      $region11: #{tpu_custom_call.1} parent=5 // pred_region
        %s197 = ssub.s32 %s21, 1
        // Predicated region
        $region13: #{tpu_custom_call.1} parent=11 // pred_check
          %p198 = pneg %p94
        $region14: #{tpu_custom_call.1} parent=11 // pred_check_branch
          %200 = sbr.rel (%p198) target = $region16
        $region15: #{tpu_custom_call.1} parent=11 // pred_region
          _
        $region16: #{tpu_custom_call.1} parent=11 // pred_fallthru
          _
        // Predicated region
        $region17: #{tpu_custom_call.1} parent=11 // pred_check
          %p201 = pneg %p115
        $region18: #{tpu_custom_call.1} parent=11 // pred_check_branch
          %203 = sbr.rel (%p201) target = $region20
        $region19: #{tpu_custom_call.1} parent=11 // pred_region
          _
        $region20: #{tpu_custom_call.1} parent=11 // pred_fallthru
          _
        // Predicated region
        $region21: #{tpu_custom_call.1} parent=11 // pred_check
          %p204 = pneg %p136
        $region22: #{tpu_custom_call.1} parent=11 // pred_check_branch
          %206 = sbr.rel (%p204) target = $region24
        $region23: #{tpu_custom_call.1} parent=11 // pred_region
          %208 = vsyncadd [#allocation6], 0
          %s209 = sshll.u32 %s4, 4
          %s210 = int_to_ptr.hbm [resolvable:$true] %s209
          %s211 = sshll.u32 [#allocation7], 4
          %s212 = int_to_ptr.vmem [resolvable:$true] %s211
          %217 = dma.hbm_to_vmem [thread:$0]  %s210, 2048, %s212, [#allocation6], 128, 128, 8
        $region24: #{tpu_custom_call.1} parent=11 // pred_fallthru
          _
        // Predicated region
        $region25: #{tpu_custom_call.1} parent=11 // pred_check
          %p218 = pneg %p157
        $region26: #{tpu_custom_call.1} parent=11 // pred_check_branch
          %220 = sbr.rel (%p218) target = $region28
        $region27: #{tpu_custom_call.1} parent=11 // pred_region
          _
        $region28: #{tpu_custom_call.1} parent=11 // pred_fallthru
          _
      $region12: #{tpu_custom_call.1} parent=5 // pred_fallthru
        _
      %p221 = scmp.lt.s32.totalorder %s21, 2
      // Predicated region
      $region29: #{tpu_custom_call.1} parent=5 // pred_check
        %p222 = pneg %p221
      $region30: #{tpu_custom_call.1} parent=5 // pred_check_branch
        %224 = sbr.rel (%p222) target = $region32
      $region31: #{tpu_custom_call.1} parent=5 // pred_region
        // Predicated region
        $region33: #{tpu_custom_call.1} parent=31 // pred_check
          %p225 = pneg %p41
        $region34: #{tpu_custom_call.1} parent=31 // pred_check_branch
          %227 = sbr.rel (%p225) target = $region36
        $region35: #{tpu_custom_call.1} parent=31 // pred_region
          %s228 = sand.u32 %s31, 1
          %s229 = scalar_lea.sflag [#allocation3], %s228
          %s230 = sand.u32 %s31, 1
          %s231 = smul.addr %s230, 128
          %s232 = scalar_lea.vmem [#allocation2], %s231
          %s233 = smul.u32 16, %s21
          %235 = vsyncadd %s229, 0
          %s236 = smul.addr %s233, 8
          %s237 = scalar_lea.hbm %s0, %s236
          %s238 = sshll.u32 %s237, 4
          %s239 = int_to_ptr.hbm [resolvable:$true] %s238
          %s240 = sshll.u32 %s232, 4
          %s241 = int_to_ptr.vmem [resolvable:$true] %s240
          %246 = dma.hbm_to_vmem [thread:$0]  %s239, 2048, %s241, %s229, 128, 128, 8
        $region36: #{tpu_custom_call.1} parent=31 // pred_fallthru
          _
        // Predicated region
        $region37: #{tpu_custom_call.1} parent=31 // pred_check
          %p247 = pneg %p67
        $region38: #{tpu_custom_call.1} parent=31 // pred_check_branch
          %249 = sbr.rel (%p247) target = $region40
        $region39: #{tpu_custom_call.1} parent=31 // pred_region
          %s250 = sand.u32 %s21, 1
          %s251 = scalar_lea.sflag [#allocation6], %s250
          %s252 = sand.u32 %s57, 1
          %s253 = smul.addr %s252, 128
          %s254 = scalar_lea.vmem [#allocation5], %s253
          %s255 = smul.u32 16, %s21
          %257 = vsyncadd %s251, 0
          %s258 = smul.addr %s255, 8
          %s259 = scalar_lea.hbm %s1, %s258
          %s260 = sshll.u32 %s259, 4
          %s261 = int_to_ptr.hbm [resolvable:$true] %s260
          %s262 = sshll.u32 %s254, 4
          %s263 = int_to_ptr.vmem [resolvable:$true] %s262
          %268 = dma.hbm_to_vmem [thread:$0]  %s261, 2048, %s263, %s251, 128, 128, 8
        $region40: #{tpu_custom_call.1} parent=31 // pred_fallthru
          _
      $region32: #{tpu_custom_call.1} parent=5 // pred_fallthru
        _
      %p269 = scmp.le.s32.totalorder 1, %s21
      %p270 = scmp.lt.s32.totalorder %s21, 3
      %p271 = pnand %p269, %p270
      %p272 = pneg %p271
      // Predicated region
      $region41: #{tpu_custom_call.1} parent=5 // pred_check
        _
      $region42: #{tpu_custom_call.1} parent=5 // pred_check_branch
        %274 = sbr.rel (%p271) target = $region44
      $region43: #{tpu_custom_call.1} parent=5 // pred_region
        %s275 = ssub.s32 %s21, 1
        %s276 = sand.u32 %s34, 1
        %s277 = scalar_lea.sflag [#allocation3], %s276
        %s278 = sand.u32 %s34, 1
        %s279 = smul.addr %s278, 128
        %s280 = scalar_lea.vmem [#allocation2], %s279
        // Predicated region
        $region45: #{tpu_custom_call.1} parent=43 // pred_check
          %p281 = pneg %p47
        $region46: #{tpu_custom_call.1} parent=43 // pred_check_branch
          %283 = sbr.rel (%p281) target = $region48
        $region47: #{tpu_custom_call.1} parent=43 // pred_region
          %285 = dma.done %s277, 2048
        $region48: #{tpu_custom_call.1} parent=43 // pred_fallthru
          _
        %s286 = sand.u32 %s26, 1
        %s287 = scalar_lea.sflag [#allocation6], %s286
        %s288 = sand.u32 %s60, 1
        %s289 = smul.addr %s288, 128
        %s290 = scalar_lea.vmem [#allocation5], %s289
        // Predicated region
        $region49: #{tpu_custom_call.1} parent=43 // pred_check
          %p291 = pneg %p73
        $region50: #{tpu_custom_call.1} parent=43 // pred_check_branch
          %293 = sbr.rel (%p291) target = $region52
        $region51: #{tpu_custom_call.1} parent=43 // pred_region
          %295 = dma.done %s287, 2048
        $region52: #{tpu_custom_call.1} parent=43 // pred_fallthru
          _
        // Predicated region
        $region53: #{tpu_custom_call.1} parent=43 // pred_check
          %p296 = pneg %p136
        $region54: #{tpu_custom_call.1} parent=43 // pred_check_branch
          %298 = sbr.rel (%p296) target = $region56
        $region55: #{tpu_custom_call.1} parent=43 // pred_region
          %300 = dma.done [#allocation6], 2048
        $region56: #{tpu_custom_call.1} parent=43 // pred_fallthru
          _
        %s301 = sand.u32 %s34, 1
        %s302 = scalar_lea.sflag [#allocation3], %s301
        %s303 = sand.u32 %s34, 1
        %s304 = smul.addr %s303, 128
        %s305 = scalar_lea.vmem [#allocation2], %s304
        %p306 = pneg %p47
        %p307 = pneg %p44
        %s308 = sand.u32 %s26, 1
        %s309 = scalar_lea.sflag [#allocation6], %s308
        %s310 = sand.u32 %s60, 1
        %s311 = smul.addr %s310, 128
        %s312 = scalar_lea.vmem [#allocation5], %s311
        %p313 = pneg %p73
        %p314 = pneg %p70
        %p315 = pneg %p94
        %p316 = pneg %p91
        %p317 = pneg %p115
        %p318 = pneg %p112
        %p319 = pneg %p136
        %p320 = pneg %p133
        %p321 = pneg %p157
        %p322 = pneg %p154
        %p323 = pneg %p183
        %p324 = pneg %p180
        %s325 = sand.u32 %s170, 1
        %s326 = scalar_lea.sflag [#allocation4], %s325
        %s327 = sand.u32 %s170, 1
        %s328 = smul.addr %s327, 128
        %s329 = scalar_lea.vmem [#allocation8], %s328
        %s330 = smul.u32 16, %s26
        %s331 = smul.u32 16, %s26
        %s332 = smul.u32 16, %s26
        %v333 = vld [vmem:[%s280] sm:$0xff]
        %v334 = vld [vmem:[%s280 + $0x8] sm:$0xff]
        %v335 = vld [vmem:[%s280 + $0x10] sm:$0xff]
        %v336 = vld [vmem:[%s280 + $0x18] sm:$0xff]
        %v337 = vld [vmem:[%s280 + $0x20] sm:$0xff]
        %v338 = vld [vmem:[%s280 + $0x28] sm:$0xff]
        %v339 = vld [vmem:[%s280 + $0x30] sm:$0xff]
        %v340 = vld [vmem:[%s280 + $0x38] sm:$0xff]
        %v341 = vld [vmem:[%s280 + $0x40] sm:$0xff]
        %v342 = vld [vmem:[%s280 + $0x48] sm:$0xff]
        %v343 = vld [vmem:[%s280 + $0x50] sm:$0xff]
        %v344 = vld [vmem:[%s280 + $0x58] sm:$0xff]
        %v345 = vld [vmem:[%s280 + $0x60] sm:$0xff]
        %v346 = vld [vmem:[%s280 + $0x68] sm:$0xff]
        %v347 = vld [vmem:[%s280 + $0x70] sm:$0xff]
        %v348 = vld [vmem:[%s280 + $0x78] sm:$0xff]
        %349 = vadd.xlane.f32.xlu0 %v333
        %v350 = vpop.xlane.xlu0 %349
        %351 = vadd.xlane.f32.xlu0 %v334
        %v352 = vpop.xlane.xlu0 %351
        %353 = vadd.xlane.f32.xlu0 %v335
        %v354 = vpop.xlane.xlu0 %353
        %355 = vadd.xlane.f32.xlu0 %v336
        %v356 = vpop.xlane.xlu0 %355
        %357 = vadd.xlane.f32.xlu0 %v337
        %v358 = vpop.xlane.xlu0 %357
        %359 = vadd.xlane.f32.xlu0 %v338
        %v360 = vpop.xlane.xlu0 %359
        %361 = vadd.xlane.f32.xlu0 %v339
        %v362 = vpop.xlane.xlu0 %361
        %363 = vadd.xlane.f32.xlu0 %v340
        %v364 = vpop.xlane.xlu0 %363
        %365 = vadd.xlane.f32.xlu0 %v341
        %v366 = vpop.xlane.xlu0 %365
        %367 = vadd.xlane.f32.xlu0 %v342
        %v368 = vpop.xlane.xlu0 %367
        %369 = vadd.xlane.f32.xlu0 %v343
        %v370 = vpop.xlane.xlu0 %369
        %371 = vadd.xlane.f32.xlu0 %v344
        %v372 = vpop.xlane.xlu0 %371
        %373 = vadd.xlane.f32.xlu0 %v345
        %v374 = vpop.xlane.xlu0 %373
        %375 = vadd.xlane.f32.xlu0 %v346
        %v376 = vpop.xlane.xlu0 %375
        %377 = vadd.xlane.f32.xlu0 %v347
        %v378 = vpop.xlane.xlu0 %377
        %379 = vadd.xlane.f32.xlu0 %v348
        %v380 = vpop.xlane.xlu0 %379
        %v381 = vrcp.pop 128.0
        %v382 = vmul.f32 128.0, %v381
        %v383 = vsub.f32 1.0, %v382
        %v384 = vmul.f32 %v381, %v383
        %v385 = vadd.f32 %v381, %v384
        %vm386 = vweird.f32 %v381
        %v387 = vsel %vm386, %v381, %v385
        %v388 = vmul.f32 %v350, %v387
        %v389 = vmul.f32 %v352, %v387
        %v390 = vmul.f32 %v354, %v387
        %v391 = vmul.f32 %v356, %v387
        %v392 = vmul.f32 %v358, %v387
        %v393 = vmul.f32 %v360, %v387
        %v394 = vmul.f32 %v362, %v387
        %v395 = vmul.f32 %v364, %v387
        %v396 = vmul.f32 %v366, %v387
        %v397 = vmul.f32 %v368, %v387
        %v398 = vmul.f32 %v370, %v387
        %v399 = vmul.f32 %v372, %v387
        %v400 = vmul.f32 %v374, %v387
        %v401 = vmul.f32 %v376, %v387
        %v402 = vmul.f32 %v378, %v387
        %v403 = vmul.f32 %v380, %v387
        %v404 = vsub.f32 %v333, %v388
        %v405 = vsub.f32 %v334, %v389
        %v406 = vsub.f32 %v335, %v390
        %v407 = vsub.f32 %v336, %v391
        %v408 = vsub.f32 %v337, %v392
        %v409 = vsub.f32 %v338, %v393
        %v410 = vsub.f32 %v339, %v394
        %v411 = vsub.f32 %v340, %v395
        %v412 = vsub.f32 %v341, %v396
        %v413 = vsub.f32 %v342, %v397
        %v414 = vsub.f32 %v343, %v398
        %v415 = vsub.f32 %v344, %v399
        %v416 = vsub.f32 %v345, %v400
        %v417 = vsub.f32 %v346, %v401
        %v418 = vsub.f32 %v347, %v402
        %v419 = vsub.f32 %v348, %v403
        %v420 = vmul.f32 %v404, %v404
        %v421 = vmul.f32 %v405, %v405
        %v422 = vmul.f32 %v406, %v406
        %v423 = vmul.f32 %v407, %v407
        %v424 = vmul.f32 %v408, %v408
        %v425 = vmul.f32 %v409, %v409
        %v426 = vmul.f32 %v410, %v410
        %v427 = vmul.f32 %v411, %v411
        %v428 = vmul.f32 %v412, %v412
        %v429 = vmul.f32 %v413, %v413
        %v430 = vmul.f32 %v414, %v414
        %v431 = vmul.f32 %v415, %v415
        %v432 = vmul.f32 %v416, %v416
        %v433 = vmul.f32 %v417, %v417
        %v434 = vmul.f32 %v418, %v418
        %v435 = vmul.f32 %v419, %v419
        %436 = vadd.xlane.f32.xlu0 %v420
        %v437 = vpop.xlane.xlu0 %436
        %438 = vadd.xlane.f32.xlu0 %v421
        %v439 = vpop.xlane.xlu0 %438
        %440 = vadd.xlane.f32.xlu0 %v422
        %v441 = vpop.xlane.xlu0 %440
        %442 = vadd.xlane.f32.xlu0 %v423
        %v443 = vpop.xlane.xlu0 %442
        %444 = vadd.xlane.f32.xlu0 %v424
        %v445 = vpop.xlane.xlu0 %444
        %446 = vadd.xlane.f32.xlu0 %v425
        %v447 = vpop.xlane.xlu0 %446
        %448 = vadd.xlane.f32.xlu0 %v426
        %v449 = vpop.xlane.xlu0 %448
        %450 = vadd.xlane.f32.xlu0 %v427
        %v451 = vpop.xlane.xlu0 %450
        %452 = vadd.xlane.f32.xlu0 %v428
        %v453 = vpop.xlane.xlu0 %452
        %454 = vadd.xlane.f32.xlu0 %v429
        %v455 = vpop.xlane.xlu0 %454
        %456 = vadd.xlane.f32.xlu0 %v430
        %v457 = vpop.xlane.xlu0 %456
        %458 = vadd.xlane.f32.xlu0 %v431
        %v459 = vpop.xlane.xlu0 %458
        %460 = vadd.xlane.f32.xlu0 %v432
        %v461 = vpop.xlane.xlu0 %460
        %462 = vadd.xlane.f32.xlu0 %v433
        %v463 = vpop.xlane.xlu0 %462
        %464 = vadd.xlane.f32.xlu0 %v434
        %v465 = vpop.xlane.xlu0 %464
        %466 = vadd.xlane.f32.xlu0 %v435
        %v467 = vpop.xlane.xlu0 %466
        %v468 = vmul.f32 %v437, 0.007874016
        %v469 = vmul.f32 %v439, 0.007874016
        %v470 = vmul.f32 %v441, 0.007874016
        %v471 = vmul.f32 %v443, 0.007874016
        %v472 = vmul.f32 %v445, 0.007874016
        %v473 = vmul.f32 %v447, 0.007874016
        %v474 = vmul.f32 %v449, 0.007874016
        %v475 = vmul.f32 %v451, 0.007874016
        %v476 = vmul.f32 %v453, 0.007874016
        %v477 = vmul.f32 %v455, 0.007874016
        %v478 = vmul.f32 %v457, 0.007874016
        %v479 = vmul.f32 %v459, 0.007874016
        %v480 = vmul.f32 %v461, 0.007874016
        %v481 = vmul.f32 %v463, 0.007874016
        %v482 = vmul.f32 %v465, 0.007874016
        %v483 = vmul.f32 %v467, 0.007874016
        %v484 = vrsqrt.pop %v468
        %v485 = vmul.f32 %v484, %v468
        %v486 = vmul.f32 %v485, %v484
        %v487 = vmul.f32 0.5, %v486
        %v488 = vsub.f32 1.5, %v487
        %v489 = vmul.f32 %v484, %v488
        %v490 = vmul.f32 %v468, %v489
        %vm491 = vcmp.eq.f32.partialorder %v468, inf
        %v492 = vsel %vm491, %v468, %v490
        %vm493 = vcmp.eq.f32.partialorder %v468, 0.0
        %v494 = vand.u32 %v468, 2147483648
        %v495 = vsel %vm493, %v494, %v492
        %v496 = vrsqrt.pop %v469
        %v497 = vmul.f32 %v496, %v469
        %v498 = vmul.f32 %v497, %v496
        %v499 = vmul.f32 0.5, %v498
        %v500 = vsub.f32 1.5, %v499
        %v501 = vmul.f32 %v496, %v500
        %v502 = vmul.f32 %v469, %v501
        %vm503 = vcmp.eq.f32.partialorder %v469, inf
        %v504 = vsel %vm503, %v469, %v502
        %vm505 = vcmp.eq.f32.partialorder %v469, 0.0
        %v506 = vand.u32 %v469, 2147483648
        %v507 = vsel %vm505, %v506, %v504
        %v508 = vrsqrt.pop %v470
        %v509 = vmul.f32 %v508, %v470
        %v510 = vmul.f32 %v509, %v508
        %v511 = vmul.f32 0.5, %v510
        %v512 = vsub.f32 1.5, %v511
        %v513 = vmul.f32 %v508, %v512
        %v514 = vmul.f32 %v470, %v513
        %vm515 = vcmp.eq.f32.partialorder %v470, inf
        %v516 = vsel %vm515, %v470, %v514
        %vm517 = vcmp.eq.f32.partialorder %v470, 0.0
        %v518 = vand.u32 %v470, 2147483648
        %v519 = vsel %vm517, %v518, %v516
        %v520 = vrsqrt.pop %v471
        %v521 = vmul.f32 %v520, %v471
        %v522 = vmul.f32 %v521, %v520
        %v523 = vmul.f32 0.5, %v522
        %v524 = vsub.f32 1.5, %v523
        %v525 = vmul.f32 %v520, %v524
        %v526 = vmul.f32 %v471, %v525
        %vm527 = vcmp.eq.f32.partialorder %v471, inf
        %v528 = vsel %vm527, %v471, %v526
        %vm529 = vcmp.eq.f32.partialorder %v471, 0.0
        %v530 = vand.u32 %v471, 2147483648
        %v531 = vsel %vm529, %v530, %v528
        %v532 = vrsqrt.pop %v472
        %v533 = vmul.f32 %v532, %v472
        %v534 = vmul.f32 %v533, %v532
        %v535 = vmul.f32 0.5, %v534
        %v536 = vsub.f32 1.5, %v535
        %v537 = vmul.f32 %v532, %v536
        %v538 = vmul.f32 %v472, %v537
        %vm539 = vcmp.eq.f32.partialorder %v472, inf
        %v540 = vsel %vm539, %v472, %v538
        %vm541 = vcmp.eq.f32.partialorder %v472, 0.0
        %v542 = vand.u32 %v472, 2147483648
        %v543 = vsel %vm541, %v542, %v540
        %v544 = vrsqrt.pop %v473
        %v545 = vmul.f32 %v544, %v473
        %v546 = vmul.f32 %v545, %v544
        %v547 = vmul.f32 0.5, %v546
        %v548 = vsub.f32 1.5, %v547
        %v549 = vmul.f32 %v544, %v548
        %v550 = vmul.f32 %v473, %v549
        %vm551 = vcmp.eq.f32.partialorder %v473, inf
        %v552 = vsel %vm551, %v473, %v550
        %vm553 = vcmp.eq.f32.partialorder %v473, 0.0
        %v554 = vand.u32 %v473, 2147483648
        %v555 = vsel %vm553, %v554, %v552
        %v556 = vrsqrt.pop %v474
        %v557 = vmul.f32 %v556, %v474
        %v558 = vmul.f32 %v557, %v556
        %v559 = vmul.f32 0.5, %v558
        %v560 = vsub.f32 1.5, %v559
        %v561 = vmul.f32 %v556, %v560
        %v562 = vmul.f32 %v474, %v561
        %vm563 = vcmp.eq.f32.partialorder %v474, inf
        %v564 = vsel %vm563, %v474, %v562
        %vm565 = vcmp.eq.f32.partialorder %v474, 0.0
        %v566 = vand.u32 %v474, 2147483648
        %v567 = vsel %vm565, %v566, %v564
        %v568 = vrsqrt.pop %v475
        %v569 = vmul.f32 %v568, %v475
        %v570 = vmul.f32 %v569, %v568
        %v571 = vmul.f32 0.5, %v570
        %v572 = vsub.f32 1.5, %v571
        %v573 = vmul.f32 %v568, %v572
        %v574 = vmul.f32 %v475, %v573
        %vm575 = vcmp.eq.f32.partialorder %v475, inf
        %v576 = vsel %vm575, %v475, %v574
        %vm577 = vcmp.eq.f32.partialorder %v475, 0.0
        %v578 = vand.u32 %v475, 2147483648
        %v579 = vsel %vm577, %v578, %v576
        %v580 = vrsqrt.pop %v476
        %v581 = vmul.f32 %v580, %v476
        %v582 = vmul.f32 %v581, %v580
        %v583 = vmul.f32 0.5, %v582
        %v584 = vsub.f32 1.5, %v583
        %v585 = vmul.f32 %v580, %v584
        %v586 = vmul.f32 %v476, %v585
        %vm587 = vcmp.eq.f32.partialorder %v476, inf
        %v588 = vsel %vm587, %v476, %v586
        %vm589 = vcmp.eq.f32.partialorder %v476, 0.0
        %v590 = vand.u32 %v476, 2147483648
        %v591 = vsel %vm589, %v590, %v588
        %v592 = vrsqrt.pop %v477
        %v593 = vmul.f32 %v592, %v477
        %v594 = vmul.f32 %v593, %v592
        %v595 = vmul.f32 0.5, %v594
        %v596 = vsub.f32 1.5, %v595
        %v597 = vmul.f32 %v592, %v596
        %v598 = vmul.f32 %v477, %v597
        %vm599 = vcmp.eq.f32.partialorder %v477, inf
        %v600 = vsel %vm599, %v477, %v598
        %vm601 = vcmp.eq.f32.partialorder %v477, 0.0
        %v602 = vand.u32 %v477, 2147483648
        %v603 = vsel %vm601, %v602, %v600
        %v604 = vrsqrt.pop %v478
        %v605 = vmul.f32 %v604, %v478
        %v606 = vmul.f32 %v605, %v604
        %v607 = vmul.f32 0.5, %v606
        %v608 = vsub.f32 1.5, %v607
        %v609 = vmul.f32 %v604, %v608
        %v610 = vmul.f32 %v478, %v609
        %vm611 = vcmp.eq.f32.partialorder %v478, inf
        %v612 = vsel %vm611, %v478, %v610
        %vm613 = vcmp.eq.f32.partialorder %v478, 0.0
        %v614 = vand.u32 %v478, 2147483648
        %v615 = vsel %vm613, %v614, %v612
        %v616 = vrsqrt.pop %v479
        %v617 = vmul.f32 %v616, %v479
        %v618 = vmul.f32 %v617, %v616
        %v619 = vmul.f32 0.5, %v618
        %v620 = vsub.f32 1.5, %v619
        %v621 = vmul.f32 %v616, %v620
        %v622 = vmul.f32 %v479, %v621
        %vm623 = vcmp.eq.f32.partialorder %v479, inf
        %v624 = vsel %vm623, %v479, %v622
        %vm625 = vcmp.eq.f32.partialorder %v479, 0.0
        %v626 = vand.u32 %v479, 2147483648
        %v627 = vsel %vm625, %v626, %v624
        %v628 = vrsqrt.pop %v480
        %v629 = vmul.f32 %v628, %v480
        %v630 = vmul.f32 %v629, %v628
        %v631 = vmul.f32 0.5, %v630
        %v632 = vsub.f32 1.5, %v631
        %v633 = vmul.f32 %v628, %v632
        %v634 = vmul.f32 %v480, %v633
        %vm635 = vcmp.eq.f32.partialorder %v480, inf
        %v636 = vsel %vm635, %v480, %v634
        %vm637 = vcmp.eq.f32.partialorder %v480, 0.0
        %v638 = vand.u32 %v480, 2147483648
        %v639 = vsel %vm637, %v638, %v636
        %v640 = vrsqrt.pop %v481
        %v641 = vmul.f32 %v640, %v481
        %v642 = vmul.f32 %v641, %v640
        %v643 = vmul.f32 0.5, %v642
        %v644 = vsub.f32 1.5, %v643
        %v645 = vmul.f32 %v640, %v644
        %v646 = vmul.f32 %v481, %v645
        %vm647 = vcmp.eq.f32.partialorder %v481, inf
        %v648 = vsel %vm647, %v481, %v646
        %vm649 = vcmp.eq.f32.partialorder %v481, 0.0
        %v650 = vand.u32 %v481, 2147483648
        %v651 = vsel %vm649, %v650, %v648
        %v652 = vrsqrt.pop %v482
        %v653 = vmul.f32 %v652, %v482
        %v654 = vmul.f32 %v653, %v652
        %v655 = vmul.f32 0.5, %v654
        %v656 = vsub.f32 1.5, %v655
        %v657 = vmul.f32 %v652, %v656
        %v658 = vmul.f32 %v482, %v657
        %vm659 = vcmp.eq.f32.partialorder %v482, inf
        %v660 = vsel %vm659, %v482, %v658
        %vm661 = vcmp.eq.f32.partialorder %v482, 0.0
        %v662 = vand.u32 %v482, 2147483648
        %v663 = vsel %vm661, %v662, %v660
        %v664 = vrsqrt.pop %v483
        %v665 = vmul.f32 %v664, %v483
        %v666 = vmul.f32 %v665, %v664
        %v667 = vmul.f32 0.5, %v666
        %v668 = vsub.f32 1.5, %v667
        %v669 = vmul.f32 %v664, %v668
        %v670 = vmul.f32 %v483, %v669
        %vm671 = vcmp.eq.f32.partialorder %v483, inf
        %v672 = vsel %vm671, %v483, %v670
        %vm673 = vcmp.eq.f32.partialorder %v483, 0.0
        %v674 = vand.u32 %v483, 2147483648
        %v675 = vsel %vm673, %v674, %v672
        %v676 = vadd.f32 %v495, 1e-06
        %v677 = vadd.f32 %v507, 1e-06
        %v678 = vadd.f32 %v519, 1e-06
        %v679 = vadd.f32 %v531, 1e-06
        %v680 = vadd.f32 %v543, 1e-06
        %v681 = vadd.f32 %v555, 1e-06
        %v682 = vadd.f32 %v567, 1e-06
        %v683 = vadd.f32 %v579, 1e-06
        %v684 = vadd.f32 %v591, 1e-06
        %v685 = vadd.f32 %v603, 1e-06
        %v686 = vadd.f32 %v615, 1e-06
        %v687 = vadd.f32 %v627, 1e-06
        %v688 = vadd.f32 %v639, 1e-06
        %v689 = vadd.f32 %v651, 1e-06
        %v690 = vadd.f32 %v663, 1e-06
        %v691 = vadd.f32 %v675, 1e-06
        %v692 = vrcp.pop %v676
        %v693 = vmul.f32 %v676, %v692
        %v694 = vsub.f32 1.0, %v693
        %v695 = vmul.f32 %v692, %v694
        %v696 = vadd.f32 %v692, %v695
        %vm697 = vweird.f32 %v676
        %vm698 = vweird.f32 %v692
        %vm699 = vmor %vm697, %vm698
        %v700 = vsel %vm699, %v692, %v696
        %v701 = vand.u32 2147483647, %v676
        %vm702 = vcmp.eq.f32.partialorder %v701, 8.507059e+37
        %v703 = vand.u32 %v676, 2147483648
        %v704 = vor.u32 1.1754944e-38, %v703
        %v705 = vsel %vm702, %v704, %v700
        %v706 = vmul.f32 1.0, %v705
        %v707 = vrcp.pop %v677
        %v708 = vmul.f32 %v677, %v707
        %v709 = vsub.f32 1.0, %v708
        %v710 = vmul.f32 %v707, %v709
        %v711 = vadd.f32 %v707, %v710
        %vm712 = vweird.f32 %v677
        %vm713 = vweird.f32 %v707
        %vm714 = vmor %vm712, %vm713
        %v715 = vsel %vm714, %v707, %v711
        %v716 = vand.u32 2147483647, %v677
        %vm717 = vcmp.eq.f32.partialorder %v716, 8.507059e+37
        %v718 = vand.u32 %v677, 2147483648
        %v719 = vor.u32 1.1754944e-38, %v718
        %v720 = vsel %vm717, %v719, %v715
        %v721 = vmul.f32 1.0, %v720
        %v722 = vrcp.pop %v678
        %v723 = vmul.f32 %v678, %v722
        %v724 = vsub.f32 1.0, %v723
        %v725 = vmul.f32 %v722, %v724
        %v726 = vadd.f32 %v722, %v725
        %vm727 = vweird.f32 %v678
        %vm728 = vweird.f32 %v722
        %vm729 = vmor %vm727, %vm728
        %v730 = vsel %vm729, %v722, %v726
        %v731 = vand.u32 2147483647, %v678
        %vm732 = vcmp.eq.f32.partialorder %v731, 8.507059e+37
        %v733 = vand.u32 %v678, 2147483648
        %v734 = vor.u32 1.1754944e-38, %v733
        %v735 = vsel %vm732, %v734, %v730
        %v736 = vmul.f32 1.0, %v735
        %v737 = vrcp.pop %v679
        %v738 = vmul.f32 %v679, %v737
        %v739 = vsub.f32 1.0, %v738
        %v740 = vmul.f32 %v737, %v739
        %v741 = vadd.f32 %v737, %v740
        %vm742 = vweird.f32 %v679
        %vm743 = vweird.f32 %v737
        %vm744 = vmor %vm742, %vm743
        %v745 = vsel %vm744, %v737, %v741
        %v746 = vand.u32 2147483647, %v679
        %vm747 = vcmp.eq.f32.partialorder %v746, 8.507059e+37
        %v748 = vand.u32 %v679, 2147483648
        %v749 = vor.u32 1.1754944e-38, %v748
        %v750 = vsel %vm747, %v749, %v745
        %v751 = vmul.f32 1.0, %v750
        %v752 = vrcp.pop %v680
        %v753 = vmul.f32 %v680, %v752
        %v754 = vsub.f32 1.0, %v753
        %v755 = vmul.f32 %v752, %v754
        %v756 = vadd.f32 %v752, %v755
        %vm757 = vweird.f32 %v680
        %vm758 = vweird.f32 %v752
        %vm759 = vmor %vm757, %vm758
        %v760 = vsel %vm759, %v752, %v756
        %v761 = vand.u32 2147483647, %v680
        %vm762 = vcmp.eq.f32.partialorder %v761, 8.507059e+37
        %v763 = vand.u32 %v680, 2147483648
        %v764 = vor.u32 1.1754944e-38, %v763
        %v765 = vsel %vm762, %v764, %v760
        %v766 = vmul.f32 1.0, %v765
        %v767 = vrcp.pop %v681
        %v768 = vmul.f32 %v681, %v767
        %v769 = vsub.f32 1.0, %v768
        %v770 = vmul.f32 %v767, %v769
        %v771 = vadd.f32 %v767, %v770
        %vm772 = vweird.f32 %v681
        %vm773 = vweird.f32 %v767
        %vm774 = vmor %vm772, %vm773
        %v775 = vsel %vm774, %v767, %v771
        %v776 = vand.u32 2147483647, %v681
        %vm777 = vcmp.eq.f32.partialorder %v776, 8.507059e+37
        %v778 = vand.u32 %v681, 2147483648
        %v779 = vor.u32 1.1754944e-38, %v778
        %v780 = vsel %vm777, %v779, %v775
        %v781 = vmul.f32 1.0, %v780
        %v782 = vrcp.pop %v682
        %v783 = vmul.f32 %v682, %v782
        %v784 = vsub.f32 1.0, %v783
        %v785 = vmul.f32 %v782, %v784
        %v786 = vadd.f32 %v782, %v785
        %vm787 = vweird.f32 %v682
        %vm788 = vweird.f32 %v782
        %vm789 = vmor %vm787, %vm788
        %v790 = vsel %vm789, %v782, %v786
        %v791 = vand.u32 2147483647, %v682
        %vm792 = vcmp.eq.f32.partialorder %v791, 8.507059e+37
        %v793 = vand.u32 %v682, 2147483648
        %v794 = vor.u32 1.1754944e-38, %v793
        %v795 = vsel %vm792, %v794, %v790
        %v796 = vmul.f32 1.0, %v795
        %v797 = vrcp.pop %v683
        %v798 = vmul.f32 %v683, %v797
        %v799 = vsub.f32 1.0, %v798
        %v800 = vmul.f32 %v797, %v799
        %v801 = vadd.f32 %v797, %v800
        %vm802 = vweird.f32 %v683
        %vm803 = vweird.f32 %v797
        %vm804 = vmor %vm802, %vm803
        %v805 = vsel %vm804, %v797, %v801
        %v806 = vand.u32 2147483647, %v683
        %vm807 = vcmp.eq.f32.partialorder %v806, 8.507059e+37
        %v808 = vand.u32 %v683, 2147483648
        %v809 = vor.u32 1.1754944e-38, %v808
        %v810 = vsel %vm807, %v809, %v805
        %v811 = vmul.f32 1.0, %v810
        %v812 = vrcp.pop %v684
        %v813 = vmul.f32 %v684, %v812
        %v814 = vsub.f32 1.0, %v813
        %v815 = vmul.f32 %v812, %v814
        %v816 = vadd.f32 %v812, %v815
        %vm817 = vweird.f32 %v684
        %vm818 = vweird.f32 %v812
        %vm819 = vmor %vm817, %vm818
        %v820 = vsel %vm819, %v812, %v816
        %v821 = vand.u32 2147483647, %v684
        %vm822 = vcmp.eq.f32.partialorder %v821, 8.507059e+37
        %v823 = vand.u32 %v684, 2147483648
        %v824 = vor.u32 1.1754944e-38, %v823
        %v825 = vsel %vm822, %v824, %v820
        %v826 = vmul.f32 1.0, %v825
        %v827 = vrcp.pop %v685
        %v828 = vmul.f32 %v685, %v827
        %v829 = vsub.f32 1.0, %v828
        %v830 = vmul.f32 %v827, %v829
        %v831 = vadd.f32 %v827, %v830
        %vm832 = vweird.f32 %v685
        %vm833 = vweird.f32 %v827
        %vm834 = vmor %vm832, %vm833
        %v835 = vsel %vm834, %v827, %v831
        %v836 = vand.u32 2147483647, %v685
        %vm837 = vcmp.eq.f32.partialorder %v836, 8.507059e+37
        %v838 = vand.u32 %v685, 2147483648
        %v839 = vor.u32 1.1754944e-38, %v838
        %v840 = vsel %vm837, %v839, %v835
        %v841 = vmul.f32 1.0, %v840
        %v842 = vrcp.pop %v686
        %v843 = vmul.f32 %v686, %v842
        %v844 = vsub.f32 1.0, %v843
        %v845 = vmul.f32 %v842, %v844
        %v846 = vadd.f32 %v842, %v845
        %vm847 = vweird.f32 %v686
        %vm848 = vweird.f32 %v842
        %vm849 = vmor %vm847, %vm848
        %v850 = vsel %vm849, %v842, %v846
        %v851 = vand.u32 2147483647, %v686
        %vm852 = vcmp.eq.f32.partialorder %v851, 8.507059e+37
        %v853 = vand.u32 %v686, 2147483648
        %v854 = vor.u32 1.1754944e-38, %v853
        %v855 = vsel %vm852, %v854, %v850
        %v856 = vmul.f32 1.0, %v855
        %v857 = vrcp.pop %v687
        %v858 = vmul.f32 %v687, %v857
        %v859 = vsub.f32 1.0, %v858
        %v860 = vmul.f32 %v857, %v859
        %v861 = vadd.f32 %v857, %v860
        %vm862 = vweird.f32 %v687
        %vm863 = vweird.f32 %v857
        %vm864 = vmor %vm862, %vm863
        %v865 = vsel %vm864, %v857, %v861
        %v866 = vand.u32 2147483647, %v687
        %vm867 = vcmp.eq.f32.partialorder %v866, 8.507059e+37
        %v868 = vand.u32 %v687, 2147483648
        %v869 = vor.u32 1.1754944e-38, %v868
        %v870 = vsel %vm867, %v869, %v865
        %v871 = vmul.f32 1.0, %v870
        %v872 = vrcp.pop %v688
        %v873 = vmul.f32 %v688, %v872
        %v874 = vsub.f32 1.0, %v873
        %v875 = vmul.f32 %v872, %v874
        %v876 = vadd.f32 %v872, %v875
        %vm877 = vweird.f32 %v688
        %vm878 = vweird.f32 %v872
        %vm879 = vmor %vm877, %vm878
        %v880 = vsel %vm879, %v872, %v876
        %v881 = vand.u32 2147483647, %v688
        %vm882 = vcmp.eq.f32.partialorder %v881, 8.507059e+37
        %v883 = vand.u32 %v688, 2147483648
        %v884 = vor.u32 1.1754944e-38, %v883
        %v885 = vsel %vm882, %v884, %v880
        %v886 = vmul.f32 1.0, %v885
        %v887 = vrcp.pop %v689
        %v888 = vmul.f32 %v689, %v887
        %v889 = vsub.f32 1.0, %v888
        %v890 = vmul.f32 %v887, %v889
        %v891 = vadd.f32 %v887, %v890
        %vm892 = vweird.f32 %v689
        %vm893 = vweird.f32 %v887
        %vm894 = vmor %vm892, %vm893
        %v895 = vsel %vm894, %v887, %v891
        %v896 = vand.u32 2147483647, %v689
        %vm897 = vcmp.eq.f32.partialorder %v896, 8.507059e+37
        %v898 = vand.u32 %v689, 2147483648
        %v899 = vor.u32 1.1754944e-38, %v898
        %v900 = vsel %vm897, %v899, %v895
        %v901 = vmul.f32 1.0, %v900
        %v902 = vrcp.pop %v690
        %v903 = vmul.f32 %v690, %v902
        %v904 = vsub.f32 1.0, %v903
        %v905 = vmul.f32 %v902, %v904
        %v906 = vadd.f32 %v902, %v905
        %vm907 = vweird.f32 %v690
        %vm908 = vweird.f32 %v902
        %vm909 = vmor %vm907, %vm908
        %v910 = vsel %vm909, %v902, %v906
        %v911 = vand.u32 2147483647, %v690
        %vm912 = vcmp.eq.f32.partialorder %v911, 8.507059e+37
        %v913 = vand.u32 %v690, 2147483648
        %v914 = vor.u32 1.1754944e-38, %v913
        %v915 = vsel %vm912, %v914, %v910
        %v916 = vmul.f32 1.0, %v915
        %v917 = vrcp.pop %v691
        %v918 = vmul.f32 %v691, %v917
        %v919 = vsub.f32 1.0, %v918
        %v920 = vmul.f32 %v917, %v919
        %v921 = vadd.f32 %v917, %v920
        %vm922 = vweird.f32 %v691
        %vm923 = vweird.f32 %v917
        %vm924 = vmor %vm922, %vm923
        %v925 = vsel %vm924, %v917, %v921
        %v926 = vand.u32 2147483647, %v691
        %vm927 = vcmp.eq.f32.partialorder %v926, 8.507059e+37
        %v928 = vand.u32 %v691, 2147483648
        %v929 = vor.u32 1.1754944e-38, %v928
        %v930 = vsel %vm927, %v929, %v925
        %v931 = vmul.f32 1.0, %v930
        %v932 = vld [vmem:[%s2] sm:$0x1]
        %v933 = vmul.f32 %v404, %v706
        %v934 = vmul.f32 %v405, %v721
        %v935 = vmul.f32 %v406, %v736
        %v936 = vmul.f32 %v407, %v751
        %v937 = vmul.f32 %v408, %v766
        %v938 = vmul.f32 %v409, %v781
        %v939 = vmul.f32 %v410, %v796
        %v940 = vmul.f32 %v411, %v811
        %v941 = vmul.f32 %v412, %v826
        %v942 = vmul.f32 %v413, %v841
        %v943 = vmul.f32 %v414, %v856
        %v944 = vmul.f32 %v415, %v871
        %v945 = vmul.f32 %v416, %v886
        %v946 = vmul.f32 %v417, %v901
        %v947 = vmul.f32 %v418, %v916
        %v948 = vmul.f32 %v419, %v931
        %v950 = vperm.slane %v932, 0
        %v952 = vmul.f32 %v950, %v933
        %v953 = vmul.f32 %v950, %v934
        %v954 = vmul.f32 %v950, %v935
        %v955 = vmul.f32 %v950, %v936
        %v956 = vmul.f32 %v950, %v937
        %v957 = vmul.f32 %v950, %v938
        %v958 = vmul.f32 %v950, %v939
        %v959 = vmul.f32 %v950, %v940
        %v960 = vmul.f32 %v950, %v941
        %v961 = vmul.f32 %v950, %v942
        %v962 = vmul.f32 %v950, %v943
        %v963 = vmul.f32 %v950, %v944
        %v964 = vmul.f32 %v950, %v945
        %v965 = vmul.f32 %v950, %v946
        %v966 = vmul.f32 %v950, %v947
        %v967 = vmul.f32 %v950, %v948
        %v968 = vld [vmem:[%s3] sm:$0x1]
        %v970 = vperm.slane %v968, 0
        %v972 = vadd.f32 %v952, %v970
        %v973 = vadd.f32 %v953, %v970
        %v974 = vadd.f32 %v954, %v970
        %v975 = vadd.f32 %v955, %v970
        %v976 = vadd.f32 %v956, %v970
        %v977 = vadd.f32 %v957, %v970
        %v978 = vadd.f32 %v958, %v970
        %v979 = vadd.f32 %v959, %v970
        %v980 = vadd.f32 %v960, %v970
        %v981 = vadd.f32 %v961, %v970
        %v982 = vadd.f32 %v962, %v970
        %v983 = vadd.f32 %v963, %v970
        %v984 = vadd.f32 %v964, %v970
        %v985 = vadd.f32 %v965, %v970
        %v986 = vadd.f32 %v966, %v970
        %v987 = vadd.f32 %v967, %v970
        %v988 = vld [vmem:[#allocation7] sm:$0xff]
        %v989 = vld [vmem:[#allocation7 + $0x8] sm:$0xff]
        %v990 = vld [vmem:[#allocation7 + $0x10] sm:$0xff]
        %v991 = vld [vmem:[#allocation7 + $0x18] sm:$0xff]
        %v992 = vld [vmem:[#allocation7 + $0x20] sm:$0xff]
        %v993 = vld [vmem:[#allocation7 + $0x28] sm:$0xff]
        %v994 = vld [vmem:[#allocation7 + $0x30] sm:$0xff]
        %v995 = vld [vmem:[#allocation7 + $0x38] sm:$0xff]
        %v996 = vld [vmem:[#allocation7 + $0x40] sm:$0xff]
        %v997 = vld [vmem:[#allocation7 + $0x48] sm:$0xff]
        %v998 = vld [vmem:[#allocation7 + $0x50] sm:$0xff]
        %v999 = vld [vmem:[#allocation7 + $0x58] sm:$0xff]
        %v1000 = vld [vmem:[#allocation7 + $0x60] sm:$0xff]
        %v1001 = vld [vmem:[#allocation7 + $0x68] sm:$0xff]
        %v1002 = vld [vmem:[#allocation7 + $0x70] sm:$0xff]
        %v1003 = vld [vmem:[#allocation7 + $0x78] sm:$0xff]
        %v1004 = vld [vmem:[%s5] sm:$0x1]
        %v1006 = vperm.slane %v1004, 0
        %1008 = vmatpush.msra.mxu0 %v1003
        %1009 = vmatpush.msra.mxu0 %v1002
        %1010 = vmatpush.msra.mxu0 %v1001
        %1011 = vmatpush.msra.mxu0 %v1000
        %1012 = vmatpush.msra.mxu0 %v999
        %1013 = vmatpush.msra.mxu0 %v998
        %1014 = vmatpush.msra.mxu0 %v997
        %1015 = vmatpush.msra.mxu0 %v996
        %1016 = vmatpush.msra.mxu0 %v995
        %1017 = vmatpush.msra.mxu0 %v994
        %1018 = vmatpush.msra.mxu0 %v993
        %1019 = vmatpush.msra.mxu0 %v992
        %1020 = vmatpush.msra.mxu0 %v991
        %1021 = vmatpush.msra.mxu0 %v990
        %1022 = vmatpush.msra.mxu0 %v989
        %1023 = vmatpush.msra.mxu0 %v988
        %1024 = vmatmul.f32.gmra.mxu0 %v972
        %v1025 = vpop.f32.mrf.mxu0
        %v1026 = vadd.f32 %v1006, %v1025
        %1027 = vmatmul.f32.gmra.mxu0 %v973
        %v1028 = vpop.f32.mrf.mxu0
        %v1029 = vadd.f32 %v1006, %v1028
        %1030 = vmatmul.f32.gmra.mxu0 %v974
        %v1031 = vpop.f32.mrf.mxu0
        %v1032 = vadd.f32 %v1006, %v1031
        %1033 = vmatmul.f32.gmra.mxu0 %v975
        %v1034 = vpop.f32.mrf.mxu0
        %v1035 = vadd.f32 %v1006, %v1034
        %1036 = vmatmul.f32.gmra.mxu0 %v976
        %v1037 = vpop.f32.mrf.mxu0
        %v1038 = vadd.f32 %v1006, %v1037
        %1039 = vmatmul.f32.gmra.mxu0 %v977
        %v1040 = vpop.f32.mrf.mxu0
        %v1041 = vadd.f32 %v1006, %v1040
        %1042 = vmatmul.f32.gmra.mxu0 %v978
        %v1043 = vpop.f32.mrf.mxu0
        %v1044 = vadd.f32 %v1006, %v1043
        %1045 = vmatmul.f32.gmra.mxu0 %v979
        %v1046 = vpop.f32.mrf.mxu0
        %v1047 = vadd.f32 %v1006, %v1046
        %1048 = vmatmul.f32.gmra.mxu0 %v980
        %v1049 = vpop.f32.mrf.mxu0
        %v1050 = vadd.f32 %v1006, %v1049
        %1051 = vmatmul.f32.gmra.mxu0 %v981
        %v1052 = vpop.f32.mrf.mxu0
        %v1053 = vadd.f32 %v1006, %v1052
        %1054 = vmatmul.f32.gmra.mxu0 %v982
        %v1055 = vpop.f32.mrf.mxu0
        %v1056 = vadd.f32 %v1006, %v1055
        %1057 = vmatmul.f32.gmra.mxu0 %v983
        %v1058 = vpop.f32.mrf.mxu0
        %v1059 = vadd.f32 %v1006, %v1058
        %1060 = vmatmul.f32.gmra.mxu0 %v984
        %v1061 = vpop.f32.mrf.mxu0
        %v1062 = vadd.f32 %v1006, %v1061
        %1063 = vmatmul.f32.gmra.mxu0 %v985
        %v1064 = vpop.f32.mrf.mxu0
        %v1065 = vadd.f32 %v1006, %v1064
        %1066 = vmatmul.f32.gmra.mxu0 %v986
        %v1067 = vpop.f32.mrf.mxu0
        %v1068 = vadd.f32 %v1006, %v1067
        %1069 = vmatmul.f32.gmra.mxu0 %v987
        %v1070 = vpop.f32.mrf.mxu0
        %v1071 = vadd.f32 %v1006, %v1070
        %1072 = vdwg.mxu0
        %v1073 = vld [vmem:[%s290] sm:$0xff]
        %v1074 = vld [vmem:[%s290 + $0x8] sm:$0xff]
        %v1075 = vld [vmem:[%s290 + $0x10] sm:$0xff]
        %v1076 = vld [vmem:[%s290 + $0x18] sm:$0xff]
        %v1077 = vld [vmem:[%s290 + $0x20] sm:$0xff]
        %v1078 = vld [vmem:[%s290 + $0x28] sm:$0xff]
        %v1079 = vld [vmem:[%s290 + $0x30] sm:$0xff]
        %v1080 = vld [vmem:[%s290 + $0x38] sm:$0xff]
        %v1081 = vld [vmem:[%s290 + $0x40] sm:$0xff]
        %v1082 = vld [vmem:[%s290 + $0x48] sm:$0xff]
        %v1083 = vld [vmem:[%s290 + $0x50] sm:$0xff]
        %v1084 = vld [vmem:[%s290 + $0x58] sm:$0xff]
        %v1085 = vld [vmem:[%s290 + $0x60] sm:$0xff]
        %v1086 = vld [vmem:[%s290 + $0x68] sm:$0xff]
        %v1087 = vld [vmem:[%s290 + $0x70] sm:$0xff]
        %v1088 = vld [vmem:[%s290 + $0x78] sm:$0xff]
        %v1089 = vmul.f32 %v1026, %v1073
        %v1090 = vmul.f32 %v1029, %v1074
        %v1091 = vmul.f32 %v1032, %v1075
        %v1092 = vmul.f32 %v1035, %v1076
        %v1093 = vmul.f32 %v1038, %v1077
        %v1094 = vmul.f32 %v1041, %v1078
        %v1095 = vmul.f32 %v1044, %v1079
        %v1096 = vmul.f32 %v1047, %v1080
        %v1097 = vmul.f32 %v1050, %v1081
        %v1098 = vmul.f32 %v1053, %v1082
        %v1099 = vmul.f32 %v1056, %v1083
        %v1100 = vmul.f32 %v1059, %v1084
        %v1101 = vmul.f32 %v1062, %v1085
        %v1102 = vmul.f32 %v1065, %v1086
        %v1103 = vmul.f32 %v1068, %v1087
        %v1104 = vmul.f32 %v1071, %v1088
        %v1105 = vadd.f32 %v333, %v1089
        %v1106 = vadd.f32 %v334, %v1090
        %v1107 = vadd.f32 %v335, %v1091
        %v1108 = vadd.f32 %v336, %v1092
        %v1109 = vadd.f32 %v337, %v1093
        %v1110 = vadd.f32 %v338, %v1094
        %v1111 = vadd.f32 %v339, %v1095
        %v1112 = vadd.f32 %v340, %v1096
        %v1113 = vadd.f32 %v341, %v1097
        %v1114 = vadd.f32 %v342, %v1098
        %v1115 = vadd.f32 %v343, %v1099
        %v1116 = vadd.f32 %v344, %v1100
        %v1117 = vadd.f32 %v345, %v1101
        %v1118 = vadd.f32 %v346, %v1102
        %v1119 = vadd.f32 %v347, %v1103
        %v1120 = vadd.f32 %v348, %v1104
        %1121 = vst [vmem:[%s329] sm:$0xff] %v1105
        %1122 = vst [vmem:[%s329 + $0x8] sm:$0xff] %v1106
        %1123 = vst [vmem:[%s329 + $0x10] sm:$0xff] %v1107
        %1124 = vst [vmem:[%s329 + $0x18] sm:$0xff] %v1108
        %1125 = vst [vmem:[%s329 + $0x20] sm:$0xff] %v1109
        %1126 = vst [vmem:[%s329 + $0x28] sm:$0xff] %v1110
        %1127 = vst [vmem:[%s329 + $0x30] sm:$0xff] %v1111
        %1128 = vst [vmem:[%s329 + $0x38] sm:$0xff] %v1112
        %1129 = vst [vmem:[%s329 + $0x40] sm:$0xff] %v1113
        %1130 = vst [vmem:[%s329 + $0x48] sm:$0xff] %v1114
        %1131 = vst [vmem:[%s329 + $0x50] sm:$0xff] %v1115
        %1132 = vst [vmem:[%s329 + $0x58] sm:$0xff] %v1116
        %1133 = vst [vmem:[%s329 + $0x60] sm:$0xff] %v1117
        %1134 = vst [vmem:[%s329 + $0x68] sm:$0xff] %v1118
        %1135 = vst [vmem:[%s329 + $0x70] sm:$0xff] %v1119
        %1136 = vst [vmem:[%s329 + $0x78] sm:$0xff] %v1120
        %s1137 = sand.u32 %s170, 1
        %s1138 = scalar_lea.sflag [#allocation4], %s1137
        %s1139 = sand.u32 %s170, 1
        %s1140 = smul.addr %s1139, 128
        %s1141 = scalar_lea.vmem [#allocation8], %s1140
        // Predicated region
        $region57: #{tpu_custom_call.1} parent=43 // pred_check
          %p1142 = pneg %p180
        $region58: #{tpu_custom_call.1} parent=43 // pred_check_branch
          %1144 = sbr.rel (%p1142) target = $region60
        $region59: #{tpu_custom_call.1} parent=43 // pred_region
          %s1145 = smul.u32 16, %s26
          %1147 = vsyncadd %s1138, 0
          %s1148 = smul.addr %s1145, 8
          %s1149 = scalar_lea.hbm %s6, %s1148
          %s1150 = sshll.u32 %s1141, 4
          %s1151 = int_to_ptr.vmem [resolvable:$true] %s1150
          %s1152 = sshll.u32 %s1149, 4
          %s1153 = int_to_ptr.hbm [resolvable:$true] %s1152
          %1158 = dma.vmem_to_hbm [thread:$0]  %s1151, 2048, %s1153, %s1138, 128, 128, 8
        $region60: #{tpu_custom_call.1} parent=43 // pred_fallthru
          _
      $region44: #{tpu_custom_call.1} parent=5 // pred_fallthru
        _
      %p1159 = scmp.le.s32.totalorder 2, %s21
      // Predicated region
      $region61: #{tpu_custom_call.1} parent=5 // pred_check
        %p1160 = pneg %p1159
      $region62: #{tpu_custom_call.1} parent=5 // pred_check_branch
        %1162 = sbr.rel (%p1160) target = $region64
      $region63: #{tpu_custom_call.1} parent=5 // pred_region
        %s1163 = ssub.s32 %s21, 2
        // Predicated region
        $region65: #{tpu_custom_call.1} parent=63 // pred_check
          %p1164 = pneg %p186
        $region66: #{tpu_custom_call.1} parent=63 // pred_check_branch
          %1166 = sbr.rel (%p1164) target = $region68
        $region67: #{tpu_custom_call.1} parent=63 // pred_region
          %s1167 = sand.u32 %s171, 1
          %s1168 = scalar_lea.sflag [#allocation4], %s1167
          %s1169 = sand.u32 %s171, 1
          %s1170 = smul.addr %s1169, 128
          %s1171 = scalar_lea.vmem [#allocation8], %s1170
          %1173 = dma.done %s1168, 2048
        $region68: #{tpu_custom_call.1} parent=63 // pred_fallthru
          _
      $region64: #{tpu_custom_call.1} parent=5 // pred_fallthru
        _
    $region6: #{tpu_custom_call.1} parent=1 // loop_footer
      %s25 = sadd.s32 1, %s21
    $region7: #{tpu_custom_call.1} parent=1 // loop_footer_branch
      %20 = sbr.rel target = $region3
    $region8: #{tpu_custom_call.1} parent=1 // loop_exit
      _
    %1174 = vsyncpa [#allocation3], 1
    %s1175 = scalar_lea.sflag [#allocation3], 1
    %1176 = vsyncpa %s1175, 1
    %1177 = vsyncpa [#allocation6], 1
    %s1178 = scalar_lea.sflag [#allocation6], 1
    %1179 = vsyncpa %s1178, 1
    %1180 = vsyncpa [#allocation4], 1
    %s1181 = scalar_lea.sflag [#allocation4], 1
    %1182 = vsyncpa %s1181, 1

</llo_original>
